<compile_context>
chip_gen: v7x
topology: tpu7x:2x2x1
jax: 0.10.0
libtpu: 0.0.40
codegen_flags: <defaults>
</compile_context>

<pallas_src>
import math

import jax
import jax.numpy as jnp
from jax.experimental import pallas as pl
from jax.experimental.pallas import tpu as pltpu


_VMEM_LIMIT_BYTES = 48 * 1024 * 1024  # explicit scoped-VMEM budget, safe on v5e/v6e/v7x


# ---------------------------------------------------------------------------
# Kernels (weight arrives pre-transposed as (K, N) -> MXU-native contraction)
# ---------------------------------------------------------------------------

def _nonneg_flat_kernel(x_ref, w_ref, b_ref, o_ref):
    # non_negative=True, whole K in one tile: out = x @ relu(W^T) + b
    w = jnp.maximum(w_ref[...], jnp.zeros((), w_ref.dtype))      # relu on the VPU
    acc = jnp.dot(x_ref[...], w, preferred_element_type=jnp.float32)
    o_ref[...] = (acc + b_ref[...]).astype(o_ref.dtype)


def _nonneg_acc_kernel(x_ref, w_ref, b_ref, o_ref, acc_ref):
    # non_negative=True with a K grid axis and an f32 VMEM accumulator.
    k = pl.program_id(2)
    w = jnp.maximum(w_ref[...], jnp.zeros((), w_ref.dtype))
    part = jnp.dot(x_ref[...], w, preferred_element_type=jnp.float32)

    @pl.when(k == 0)
    def _():
        acc_ref[...] = part                  # write-not-zero at k == 0

    @pl.when(k > 0)
    def _():
        acc_ref[...] = acc_ref[...] + part

    @pl.when(k == pl.num_programs(2) - 1)
    def _():
        o_ref[...] = (acc_ref[...] + b_ref[...]).astype(o_ref.dtype)


def _signed_flat_kernel(x_ref, w_ref, b_ref, o_ref):
    # non_negative=False (IBP), whole K in one tile:
    #   u = (xp + xn)/2 ; r = (xp - xn)/2
    #   out_u = u @ W^T + b ; out_r = r @ |W|^T
    #   out[0] = out_u + out_r ; out[1] = out_u - out_r
    # 0.5 scaling is applied once to the (tm, tn) results, not per-element of x.
    xp = x_ref[0]
    xn = x_ref[1]
    s = xp + xn                              # 2*u
    d = xp - xn                              # 2*r
    w = w_ref[...]                           # one DMA'd tile reused for both matmuls
    acc_u = jnp.dot(s, w, preferred_element_type=jnp.float32) * 0.5
    acc_r = jnp.dot(d, jnp.abs(w), preferred_element_type=jnp.float32) * 0.5
    out_u = acc_u + b_ref[...]
    o_ref[0, :, :] = (out_u + acc_r).astype(o_ref.dtype)
    o_ref[1, :, :] = (out_u - acc_r).astype(o_ref.dtype)


def _signed_acc_kernel(x_ref, w_ref, b_ref, o_ref, acc_u_ref, acc_r_ref):
    # non_negative=False with a K grid axis; 0.5 scaling & bias in the epilogue.
    k = pl.program_id(2)
    xp = x_ref[0]
    xn = x_ref[1]
    s = xp + xn
    d = xp - xn
    w = w_ref[...]
    pu = jnp.dot(s, w, preferred_element_type=jnp.float32)
    pr = jnp.dot(d, jnp.abs(w), preferred_element_type=jnp.float32)

    @pl.when(k == 0)
    def _():
        acc_u_ref[...] = pu                  # write-not-zero at k == 0
        acc_r_ref[...] = pr

    @pl.when(k > 0)
    def _():
        acc_u_ref[...] = acc_u_ref[...] + pu
        acc_r_ref[...] = acc_r_ref[...] + pr

    @pl.when(k == pl.num_programs(2) - 1)
    def _():
        out_u = acc_u_ref[...] * 0.5 + b_ref[...]     # bias added exactly once
        out_r = acc_r_ref[...] * 0.5
        o_ref[0, :, :] = (out_u + out_r).astype(o_ref.dtype)
        o_ref[1, :, :] = (out_u - out_r).astype(o_ref.dtype)


# ---------------------------------------------------------------------------
# Wrapper
# ---------------------------------------------------------------------------

def _round_up(x, m):
    return ((x + m - 1) // m) * m


def _sublane(dtype):
    itemsize = jnp.dtype(dtype).itemsize
    return max(8, 32 // itemsize)            # 8 for f32, 16 for bf16, 32 for int8/fp8


def _pick_tiles(m, k, n, dtype, *, signed):
    sub = _sublane(dtype)
    m_al = _round_up(max(m, 1), sub)
    k_al = _round_up(max(k, 1), 128)
    n_al = _round_up(max(n, 1), 128)
    tm_cap = 256 if signed else 512          # signed path carries 2x x/out blocks
    tm = min(tm_cap, m_al)
    tk = min(1024, k_al)
    tn = min(1024, n_al)
    # Megacore (v7x): if both parallel axes would be single-block, split one so
    # both TensorCores get work (prefer the lane axis N, then M).
    if m_al <= tm and n_al <= tn:
        n_blocks = n_al // 128
        m_blocks = m_al // sub
        if n_blocks >= 2:
            tn = 128 * (n_blocks // 2)
        elif m_blocks >= 2:
            tm = sub * (m_blocks // 2)
    return tm, tk, tn


def _pad2(a, rows, cols):
    r, c = a.shape
    if r == rows and c == cols:
        return a
    return jnp.pad(a, ((0, rows - r), (0, cols - c)))


def robust_linear(x, weight, bias, *, non_negative=True):
    """Forward pass of RobustLinear.

    x:      (B, in_features), B even
    weight: (out_features, in_features)   -- PyTorch layout
    bias:   (out_features,) or None
    """
    B, K = x.shape
    N, K_w = weight.shape
    assert K_w == K, "weight in_features mismatch"
    assert B % 2 == 0, "batch must be even (split into positive/negative halves)"
    out_dtype = x.dtype

    if bias is None:
        # TODO(synk): could drop the bias input entirely when None (minor DMA saving).
        bias = jnp.zeros((N,), dtype=weight.dtype)

    # One-time wrapper-side transpose: (N, K) -> (K, N), so the in-kernel
    # contraction is MXU-native with no per-tile transpose.
    w_t = weight.T

    if non_negative:
        M = B
        tm, tk, tn = _pick_tiles(M, K, N, x.dtype, signed=False)
        Mp, Kp, Np = _round_up(M, tm), _round_up(K, tk), _round_up(N, tn)
        x_pad = _pad2(x, Mp, Kp)
        w_pad = _pad2(w_t, Kp, Np)
        b_pad = jnp.pad(bias, (0, Np - N)).reshape(1, Np)
        k_blocks = Kp // tk

        if k_blocks == 1:
            # Flat fast path: no K grid axis, no accumulator scratch.
            out = pl.pallas_call(
                _nonneg_flat_kernel,
                out_shape=jax.ShapeDtypeStruct((Mp, Np), out_dtype),
                grid_spec=pltpu.PrefetchScalarGridSpec(
                    num_scalar_prefetch=0,
                    grid=(Mp // tm, Np // tn),
                    in_specs=[
                        pl.BlockSpec((tm, tk), lambda i, j: (i, 0)),
                        pl.BlockSpec((tk, tn), lambda i, j: (0, j)),
                        pl.BlockSpec((1, tn), lambda i, j: (0, j)),
                    ],
                    out_specs=pl.BlockSpec((tm, tn), lambda i, j: (i, j)),
                ),
                compiler_params=pltpu.CompilerParams(
                    dimension_semantics=("parallel", "parallel"),
                    vmem_limit_bytes=_VMEM_LIMIT_BYTES),
            )(x_pad, w_pad, b_pad)
        else:
            out = pl.pallas_call(
                _nonneg_acc_kernel,
                out_shape=jax.ShapeDtypeStruct((Mp, Np), out_dtype),
                grid_spec=pltpu.PrefetchScalarGridSpec(
                    num_scalar_prefetch=0,
                    grid=(Mp // tm, Np // tn, k_blocks),
                    in_specs=[
                        pl.BlockSpec((tm, tk), lambda i, j, k: (i, k)),
                        pl.BlockSpec((tk, tn), lambda i, j, k: (k, j)),
                        pl.BlockSpec((1, tn), lambda i, j, k: (0, j)),
                    ],
                    out_specs=pl.BlockSpec((tm, tn), lambda i, j, k: (i, j)),
                    scratch_shapes=[pltpu.VMEM((tm, tn), jnp.float32)],
                ),
                compiler_params=pltpu.CompilerParams(
                    dimension_semantics=("parallel", "parallel", "arbitrary"),
                    vmem_limit_bytes=_VMEM_LIMIT_BYTES),
            )(x_pad, w_pad, b_pad)
        return out[:B, :N]

    # ----- signed (IBP) path -----
    half = B // 2
    tm, tk, tn = _pick_tiles(half, K, N, x.dtype, signed=True)
    Mp, Kp, Np = _round_up(half, tm), _round_up(K, tk), _round_up(N, tn)
    x3 = x.reshape(2, half, K)
    if Mp != half or Kp != K:
        x3 = jnp.pad(x3, ((0, 0), (0, Mp - half), (0, Kp - K)))
    w_pad = _pad2(w_t, Kp, Np)
    b_pad = jnp.pad(bias, (0, Np - N)).reshape(1, Np)
    k_blocks = Kp // tk

    if k_blocks == 1:
        out = pl.pallas_call(
            _signed_flat_kernel,
            out_shape=jax.ShapeDtypeStruct((2, Mp, Np), out_dtype),
            grid_spec=pltpu.PrefetchScalarGridSpec(
                num_scalar_prefetch=0,
                grid=(Mp // tm, Np // tn),
                in_specs=[
                    pl.BlockSpec((2, tm, tk), lambda i, j: (0, i, 0)),
                    pl.BlockSpec((tk, tn), lambda i, j: (0, j)),
                    pl.BlockSpec((1, tn), lambda i, j: (0, j)),
                ],
                out_specs=pl.BlockSpec((2, tm, tn), lambda i, j: (0, i, j)),
            ),
            compiler_params=pltpu.CompilerParams(
                dimension_semantics=("parallel", "parallel"),
                vmem_limit_bytes=_VMEM_LIMIT_BYTES),
        )(x3, w_pad, b_pad)
    else:
        out = pl.pallas_call(
            _signed_acc_kernel,
            out_shape=jax.ShapeDtypeStruct((2, Mp, Np), out_dtype),
            grid_spec=pltpu.PrefetchScalarGridSpec(
                num_scalar_prefetch=0,
                grid=(Mp // tm, Np // tn, k_blocks),
                in_specs=[
                    pl.BlockSpec((2, tm, tk), lambda i, j, k: (0, i, k)),
                    pl.BlockSpec((tk, tn), lambda i, j, k: (k, j),
                                 pipeline_mode=pl.Buffered(3)),
                    pl.BlockSpec((1, tn), lambda i, j, k: (0, j)),
                ],
                out_specs=pl.BlockSpec((2, tm, tn), lambda i, j, k: (0, i, j)),
                scratch_shapes=[pltpu.VMEM((tm, tn), jnp.float32),
                                pltpu.VMEM((tm, tn), jnp.float32)],
            ),
            compiler_params=pltpu.CompilerParams(
                dimension_semantics=("parallel", "parallel", "arbitrary"),
                vmem_limit_bytes=_VMEM_LIMIT_BYTES),
        )(x3, w_pad, b_pad)
    # Both halves already live in one array; strip padding and flatten.
    return out[:, :half, :N].reshape(B, N)


# ---------------------------------------------------------------------------
# Reference (plain JAX) for a sanity check
# ---------------------------------------------------------------------------

def robust_linear_ref(x, weight, bias, *, non_negative=True):
    half = x.shape[0] // 2
    x_p, x_n = x[:half], x[half:]
    b = 0.0 if bias is None else bias
    if non_negative:
        w = jnp.maximum(weight, 0.0)
        out_p = x_p @ w.T + b
        out_n = x_n @ w.T + b
        return jnp.concatenate([out_p, out_n], axis=0)
    u = (x_p + x_n) / 2
    r = (x_p - x_n) / 2
    out_u = u @ weight.T + b
    out_r = r @ jnp.abs(weight).T
    return jnp.concatenate([out_u + out_r, out_u - out_r], axis=0)


# ---------------------------------------------------------------------------
# Main
# ---------------------------------------------------------------------------

if __name__ == "__main__":
    key = jax.random.PRNGKey(0)
    keys = jax.random.split(key, 6)

    # --- small shapes matching the module example (flat single-tile path) ---
    batch, in_features, out_features = 8, 32, 16
    x = jax.random.normal(keys[0], (batch, in_features), dtype=jnp.float32)
    w_nn = jax.random.uniform(keys[1], (out_features, in_features),
                              dtype=jnp.float32) / math.sqrt(in_features)
    w_sg = jax.random.normal(keys[2], (out_features, in_features),
                             dtype=jnp.float32) / math.sqrt(in_features)
    bias = jnp.zeros((out_features,), dtype=jnp.float32)

    out_nn = jax.block_until_ready(robust_linear(x, w_nn, bias, non_negative=True))
    ref_nn = robust_linear_ref(x, w_nn, bias, non_negative=True)
    assert out_nn.shape == (batch, out_features)
    assert jnp.allclose(out_nn, ref_nn, atol=1e-5, rtol=1e-5)

    out_sg = jax.block_until_ready(robust_linear(x, w_sg, bias, non_negative=False))
    ref_sg = robust_linear_ref(x, w_sg, bias, non_negative=False)
    assert out_sg.shape == (batch, out_features)
    assert jnp.allclose(out_sg, ref_sg, atol=1e-5, rtol=1e-5)

    out_nb = jax.block_until_ready(robust_linear(x, w_sg, None, non_negative=False))
    ref_nb = robust_linear_ref(x, w_sg, None, non_negative=False)
    assert jnp.allclose(out_nb, ref_nb, atol=1e-5, rtol=1e-5)

    # --- moderate shapes exercising the K-accumulation (multi k-step) path,
    #     the megacore N-split and non-zero bias handling ---
    B2, K2, N2 = 16, 1536, 384
    x2 = jax.random.normal(keys[3], (B2, K2), dtype=jnp.float32)
    w2 = jax.random.normal(keys[4], (N2, K2), dtype=jnp.float32) / math.sqrt(K2)
    b2 = jax.random.normal(keys[5], (N2,), dtype=jnp.float32)

    out2_nn = jax.block_until_ready(robust_linear(x2, w2, b2, non_negative=True))
    ref2_nn = robust_linear_ref(x2, w2, b2, non_negative=True)
    assert jnp.allclose(out2_nn, ref2_nn, atol=5e-3, rtol=5e-3)

    out2_sg = jax.block_until_ready(robust_linear(x2, w2, b2, non_negative=False))
    ref2_sg = robust_linear_ref(x2, w2, b2, non_negative=False)
    assert jnp.allclose(out2_sg, ref2_sg, atol=5e-3, rtol=5e-3)

    print("KERNEL_OK")
</pallas_src>

<mosaic_0001>
module attributes {stable_mosaic.version = 11 : i64} {
  func.func @_nonneg_flat_kernel(%arg0: i32, %arg1: i32, %arg2: memref<8x128xf32, #tpu.memory_space<vmem>>, %arg3: memref<128x128xf32, #tpu.memory_space<vmem>>, %arg4: memref<1x128xf32, #tpu.memory_space<vmem>>, %arg5: memref<8x128xf32, #tpu.memory_space<vmem>>) attributes {dimension_semantics = [#tpu.dimension_semantics<parallel>, #tpu.dimension_semantics<parallel>], iteration_bounds = array<i64: 1, 1>, scalar_prefetch = 0 : i64, scratch_operands = 0 : i64, tpu.core_type = #tpu.core_type<tc>, window_params = [{transform_indices = @transform_0, window_bounds = array<i64: 8, 128>}, {transform_indices = @transform_1, window_bounds = array<i64: 128, 128>}, {transform_indices = @transform_2, window_bounds = array<i64: 1, 128>}, {transform_indices = @transform_3, window_bounds = array<i64: 8, 128>}]} {
    %c0 = arith.constant 0 : index
    %c0_0 = arith.constant 0 : index
    %0 = vector.load %arg3[%c0, %c0_0] : memref<128x128xf32, #tpu.memory_space<vmem>>, vector<128x128xf32>
    %cst = arith.constant 0.000000e+00 : f32
    %1 = vector.broadcast %cst : f32 to vector<128x128xf32>
    %2 = arith.maximumf %0, %1 : vector<128x128xf32>
    %c0_1 = arith.constant 0 : index
    %c0_2 = arith.constant 0 : index
    %3 = vector.load %arg2[%c0_1, %c0_2] : memref<8x128xf32, #tpu.memory_space<vmem>>, vector<8x128xf32>
    %cst_3 = arith.constant dense<0.000000e+00> : vector<8x128xf32>
    %4 = tpu.matmul %3, %2, %cst_3 {dimension_numbers = #tpu.dot_dimension_numbers<[1], [0], [0], [1], [0, 0, 1, 1], [], []>} : vector<8x128xf32>, vector<128x128xf32>, vector<8x128xf32> -> vector<8x128xf32>
    %c0_4 = arith.constant 0 : index
    %c0_5 = arith.constant 0 : index
    %5 = vector.load %arg4[%c0_4, %c0_5] : memref<1x128xf32, #tpu.memory_space<vmem>>, vector<1x128xf32>
    %6 = vector.broadcast %5 : vector<1x128xf32> to vector<8x128xf32>
    %7 = arith.addf %4, %6 : vector<8x128xf32>
    %c0_6 = arith.constant 0 : index
    %c0_7 = arith.constant 0 : index
    %8 = vector.load %arg5[%c0_6, %c0_7] : memref<8x128xf32, #tpu.memory_space<vmem>>, vector<8x128xf32>
    tpu.vector_store %arg5[%c0_6, %c0_7], %7 {strides = array<i32>} : memref<8x128xf32, #tpu.memory_space<vmem>>, vector<8x128xf32>,
    return
  }
  func.func @transform_0(%arg0: i32, %arg1: i32) -> (i32, i32) {
    %c0_i32 = arith.constant 0 : i32
    %c0_i32_0 = arith.constant 0 : i32
    return %arg0, %c0_i32 : i32, i32
  }
  func.func @transform_1(%arg0: i32, %arg1: i32) -> (i32, i32) {
    %c0_i32 = arith.constant 0 : i32
    %c0_i32_0 = arith.constant 0 : i32
    return %c0_i32, %arg1 : i32, i32
  }
  func.func @transform_2(%arg0: i32, %arg1: i32) -> (i32, i32) {
    %c0_i32 = arith.constant 0 : i32
    %c0_i32_0 = arith.constant 0 : i32
    return %c0_i32, %arg1 : i32, i32
  }
  func.func @transform_3(%arg0: i32, %arg1: i32) -> (i32, i32) {
    %c0_i32 = arith.constant 0 : i32
    return %arg0, %arg1 : i32, i32
  }
}

</mosaic_0001>

<llo_original>
// kernel: tpu_custom_call.1
$region0: #{tpu_custom_call.1}
  #allocation0 [shape = 'u32[]', space=smem, size = 0x4, offset = 0x4, fixed_abs, tag = 'smem constant byte address 0x4 - core index']
  #allocation1 [shape = 'u32[144,128]{1,0:T(1,128)}', space=vmem, size = 0x12000, scoped, tag = 'internal scratch']
  %s0 = inlined_call_operand.hbm [shape: f32[8,128], index: 0, kind: input, shape index: {}]
  %s1 = inlined_call_operand.hbm [shape: f32[128,128], index: 1, kind: input, shape index: {}]
  %s2 = inlined_call_operand.vmem [shape: f32[1,128], index: 2, kind: input, shape index: {}]
  %s3 = inlined_call_operand.hbm [shape: f32[8,128], index: 3, kind: output, shape index: {}]
  %s4 = sld [smem:[#allocation0]]
  $region30: #{tpu_custom_call.1} parent=0
    _
  %s6 = ssub.s32 1, %s4
  %s7 = scalar_select 0, %s6, %s4
  $region1: #{tpu_custom_call.1} parent=0
    #allocation2 [shape = 'u8[4096]{0}', space=vmem, size = 0x1000, scoped, tag = 'input window, operand 0, single buffered']
    #allocation3 [shape = 's32[1]{0}', space=sflag, size = 0x4, scoped, tag = 'scoped memory for tpu_custom_call.1']
    #allocation4 [shape = 's32[1]{0}', space=sflag, size = 0x4, scoped, tag = 'scoped memory for tpu_custom_call.1']
    #allocation5 [shape = 'u8[65536]{0}', space=vmem, size = 0x10000, scoped, tag = 'input window, operand 1, single buffered']
    #allocation6 [shape = 's32[1]{0}', space=sflag, size = 0x4, scoped, tag = 'scoped memory for tpu_custom_call.1']
    #allocation7 [shape = 'u8[4096]{0}', space=vmem, size = 0x1000, scoped, tag = 'output window, operand 0, single buffered']
    %8 = vsyncpa [#allocation3], 0
    %9 = vsyncpa [#allocation6], 0
    %10 = vsyncpa [#allocation4], 0
    // Predicated region
    $region2: #{tpu_custom_call.1} parent=1 // pred_check
      _
    $region3: #{tpu_custom_call.1} parent=1 // pred_check_branch
      %12 = sbr.rel (0) target = $region5
    $region4: #{tpu_custom_call.1} parent=1 // pred_region
      %s14 = ssub.s32 128, 128
      %15 = vsyncadd [#allocation3], %s14
      %s17 = sshll.u32 [#allocation2], 4
      %s18 = int_to_ptr.vmem [resolvable:$true] %s17
      %20 = dma.hbm_to_vmem [thread:$0]  %s0, 128, %s18, [#allocation3]
    $region5: #{tpu_custom_call.1} parent=1 // pred_fallthru
      _
    // Predicated region
    $region6: #{tpu_custom_call.1} parent=1 // pred_check
      _
    $region7: #{tpu_custom_call.1} parent=1 // pred_check_branch
      %22 = sbr.rel (0) target = $region9
    $region8: #{tpu_custom_call.1} parent=1 // pred_region
      %s24 = ssub.s32 2048, 2048
      %25 = vsyncadd [#allocation6], %s24
      %s26 = sshll.u32 [#allocation5], 4
      %s27 = int_to_ptr.vmem [resolvable:$true] %s26
      %32 = dma.hbm_to_vmem [thread:$0]  %s1, 2048, %s27, [#allocation6], 128, 128, 8
    $region9: #{tpu_custom_call.1} parent=1 // pred_fallthru
      _
    // Predicated region
    $region10: #{tpu_custom_call.1} parent=1 // pred_check
      _
    $region11: #{tpu_custom_call.1} parent=1 // pred_check_branch
      %34 = sbr.rel (0) target = $region13
    $region12: #{tpu_custom_call.1} parent=1 // pred_region
      _
    $region13: #{tpu_custom_call.1} parent=1 // pred_fallthru
      _
    // Predicated region
    $region14: #{tpu_custom_call.1} parent=1 // pred_check
      _
    $region15: #{tpu_custom_call.1} parent=1 // pred_check_branch
      %36 = sbr.rel (0) target = $region17
    $region16: #{tpu_custom_call.1} parent=1 // pred_region
      %37 = dma.done [#allocation3], 128
    $region17: #{tpu_custom_call.1} parent=1 // pred_fallthru
      _
    // Predicated region
    $region18: #{tpu_custom_call.1} parent=1 // pred_check
      _
    $region19: #{tpu_custom_call.1} parent=1 // pred_check_branch
      %39 = sbr.rel (0) target = $region21
    $region20: #{tpu_custom_call.1} parent=1 // pred_region
      %40 = dma.done [#allocation6], 2048
    $region21: #{tpu_custom_call.1} parent=1 // pred_fallthru
      _
    %v41 = vld [vmem:[#allocation5] sm:$0xff]
    %v42 = vld [vmem:[#allocation5 + $0x8] sm:$0xff]
    %v43 = vld [vmem:[#allocation5 + $0x10] sm:$0xff]
    %v44 = vld [vmem:[#allocation5 + $0x18] sm:$0xff]
    %v45 = vld [vmem:[#allocation5 + $0x20] sm:$0xff]
    %v46 = vld [vmem:[#allocation5 + $0x28] sm:$0xff]
    %v47 = vld [vmem:[#allocation5 + $0x30] sm:$0xff]
    %v48 = vld [vmem:[#allocation5 + $0x38] sm:$0xff]
    %v49 = vld [vmem:[#allocation5 + $0x40] sm:$0xff]
    %v50 = vld [vmem:[#allocation5 + $0x48] sm:$0xff]
    %v51 = vld [vmem:[#allocation5 + $0x50] sm:$0xff]
    %v52 = vld [vmem:[#allocation5 + $0x58] sm:$0xff]
    %v53 = vld [vmem:[#allocation5 + $0x60] sm:$0xff]
    %v54 = vld [vmem:[#allocation5 + $0x68] sm:$0xff]
    %v55 = vld [vmem:[#allocation5 + $0x70] sm:$0xff]
    %v56 = vld [vmem:[#allocation5 + $0x78] sm:$0xff]
    %v57 = vmax.f32 %v41, 0.0
    %v58 = vmax.f32 %v42, 0.0
    %v59 = vmax.f32 %v43, 0.0
    %v60 = vmax.f32 %v44, 0.0
    %v61 = vmax.f32 %v45, 0.0
    %v62 = vmax.f32 %v46, 0.0
    %v63 = vmax.f32 %v47, 0.0
    %v64 = vmax.f32 %v48, 0.0
    %v65 = vmax.f32 %v49, 0.0
    %v66 = vmax.f32 %v50, 0.0
    %v67 = vmax.f32 %v51, 0.0
    %v68 = vmax.f32 %v52, 0.0
    %v69 = vmax.f32 %v53, 0.0
    %v70 = vmax.f32 %v54, 0.0
    %v71 = vmax.f32 %v55, 0.0
    %v72 = vmax.f32 %v56, 0.0
    %v73 = vld [vmem:[#allocation2] sm:$0xff]
    %v74 = vld [vmem:[%s2] sm:$0x1]
    %v76 = vlaneseq
    %v77 = vshrl.u32 %v76, 7
    %v78 = vsub.s32 0, %v77
    %v79 = vrot.slane %v74, %v78
    %81 = vmatprep.subr.mxu0 0.0
    %82 = vmatpush1.msra.mxu0 %v57
    %83 = vmatprep.subr.mxu0 0.0
    %84 = vmatpush1.msra.mxu0 %v58
    %85 = vmatprep.subr.mxu0 0.0
    %86 = vmatpush1.msra.mxu0 %v59
    %87 = vmatprep.subr.mxu0 0.0
    %88 = vmatpush1.msra.mxu0 %v60
    %89 = vmatprep.subr.mxu0 0.0
    %90 = vmatpush1.msra.mxu0 %v61
    %91 = vmatprep.subr.mxu0 0.0
    %92 = vmatpush1.msra.mxu0 %v62
    %93 = vmatprep.subr.mxu0 0.0
    %94 = vmatpush1.msra.mxu0 %v63
    %95 = vmatprep.subr.mxu0 0.0
    %96 = vmatpush1.msra.mxu0 %v64
    %97 = vmatprep.subr.mxu0 0.0
    %98 = vmatpush1.msra.mxu0 %v65
    %99 = vmatprep.subr.mxu0 0.0
    %100 = vmatpush1.msra.mxu0 %v66
    %101 = vmatprep.subr.mxu0 0.0
    %102 = vmatpush1.msra.mxu0 %v67
    %103 = vmatprep.subr.mxu0 0.0
    %104 = vmatpush1.msra.mxu0 %v68
    %105 = vmatprep.subr.mxu0 0.0
    %106 = vmatpush1.msra.mxu0 %v69
    %107 = vmatprep.subr.mxu0 0.0
    %108 = vmatpush1.msra.mxu0 %v70
    %109 = vmatprep.subr.mxu0 0.0
    %110 = vmatpush1.msra.mxu0 %v71
    %111 = vmatprep.subr.mxu0 0.0
    %112 = vmatpush1.msra.mxu0 %v72
    %113 = vmatprep.subr.mxu0 0.0
    %114 = vmatpush1.msra.mxu0 0.0
    %115 = vmatprep.subr.mxu0 0.0
    %116 = vmatpush1.msra.mxu0 0.0
    %117 = vmatprep.subr.mxu0 0.0
    %118 = vmatpush1.msra.mxu0 0.0
    %119 = vmatprep.subr.mxu0 0.0
    %120 = vmatpush1.msra.mxu0 0.0
    %121 = vmatprep.subr.mxu0 0.0
    %122 = vmatpush1.msra.mxu0 0.0
    %123 = vmatprep.subr.mxu0 0.0
    %124 = vmatpush1.msra.mxu0 0.0
    %125 = vmatprep.subr.mxu0 0.0
    %126 = vmatpush1.msra.mxu0 0.0
    %127 = vmatprep.subr.mxu0 0.0
    %128 = vmatpush1.msra.mxu0 0.0
    %129 = vmatprep.subr.mxu0 0.0
    %130 = vmatpush1.msra.mxu0 0.0
    %131 = vmatprep.subr.mxu0 0.0
    %132 = vmatpush1.msra.mxu0 0.0
    %133 = vmatprep.subr.mxu0 0.0
    %134 = vmatpush1.msra.mxu0 0.0
    %135 = vmatprep.subr.mxu0 0.0
    %136 = vmatpush1.msra.mxu0 0.0
    %137 = vmatprep.subr.mxu0 0.0
    %138 = vmatpush1.msra.mxu0 0.0
    %139 = vmatprep.subr.mxu0 0.0
    %140 = vmatpush1.msra.mxu0 0.0
    %141 = vmatprep.subr.mxu0 0.0
    %142 = vmatpush1.msra.mxu0 0.0
    %143 = vmatprep.subr.mxu0 0.0
    %144 = vmatpush1.msra.mxu0 0.0
    %145 = vmatprep.mubr.f32.mxu0 0.0
    %146 = vmatmul.mubr.f32.gmra.mrb[0].mxu0 %v73
    %v147 = vpop.f32.mrb[0].mxu0
    %v148 = vadd.f32 %v79, %v147
    %v149 = vpop.f32.mrb[0].mxu0
    %150 = vdwg.mxu0
    %151 = vst [vmem:[#allocation7] sm:$0xff] %v148
    // Predicated region
    $region22: #{tpu_custom_call.1} parent=1 // pred_check
      _
    $region23: #{tpu_custom_call.1} parent=1 // pred_check_branch
      %153 = sbr.rel (0) target = $region25
    $region24: #{tpu_custom_call.1} parent=1 // pred_region
      %s155 = ssub.s32 128, 128
      %156 = vsyncadd [#allocation4], %s155
      %s158 = sshll.u32 [#allocation7], 4
      %s159 = int_to_ptr.vmem [resolvable:$true] %s158
      %161 = dma.vmem_to_hbm [thread:$0]  %s159, 128, %s3, [#allocation4]
    $region25: #{tpu_custom_call.1} parent=1 // pred_fallthru
      _
    // Predicated region
    $region26: #{tpu_custom_call.1} parent=1 // pred_check
      _
    $region27: #{tpu_custom_call.1} parent=1 // pred_check_branch
      %163 = sbr.rel (0) target = $region29
    $region28: #{tpu_custom_call.1} parent=1 // pred_region
      %164 = dma.done [#allocation4], 128
    $region29: #{tpu_custom_call.1} parent=1 // pred_fallthru
      _
    %165 = vsyncpa [#allocation3], 1
    %166 = vsyncpa [#allocation6], 1
    %167 = vsyncpa [#allocation4], 1

</llo_original>
